<compile_context>
chip_gen: v7x
topology: tpu7x:2x2x1
jax: 0.10.0
libtpu: 0.0.40
codegen_flags: <defaults>
</compile_context>

<pallas_src>
import math
import functools

import jax
import jax.numpy as jnp
from jax.experimental import pallas as pl
from jax.experimental.pallas import tpu as pltpu

LN_EPS = 1e-6   # matches nn.LayerNorm(pre_logits_size, eps=1e-06) in the spec


# ----------------------------- helpers ------------------------------------- #

def _layernorm(x, g, b):
    mu = jnp.mean(x, axis=-1, keepdims=True)
    var = jnp.mean(jnp.square(x - mu), axis=-1, keepdims=True)
    return (x - mu) * jax.lax.rsqrt(var + LN_EPS) * g + b


def _vmem_limit_bytes():
    """Per-generation scoped VMEM limit: capacity - 16 MiB headroom, capped at 112 MiB."""
    cap = None
    try:
        cap = getattr(pltpu.get_tpu_info(), "vmem_capacity_bytes", None)
    except Exception:
        cap = None
    if not cap:
        cap = 64 * 1024 * 1024          # conservative fallback = v7x per-TC size
    limit = min(int(cap) - (16 << 20), 112 << 20)
    return max(limit, 32 << 20)


def _pick_batch_tile(B, S, D, FF, H, NC, vmem_limit):
    """Largest divisor of B (<=8) whose estimated f32 working set fits under the limit."""
    # bf16 matmul weights per layer, double-buffered by the pipeline.
    wmat = 2 * 2 * (D * 3 * D + D * D + D * FF + FF * D)
    # f32 per-layer biases / LN params, double-buffered.
    wvec = 2 * 4 * (3 * D + D + FF + D + 4 * D)
    # head params (resident once).
    whead = 2 * D * NC + 4 * (2 * D + NC)
    budget = vmem_limit - wmat - wvec - whead - (4 << 20)   # 4 MiB headroom
    # f32 activation footprint per batch element inside the kernel.
    act = 4 * (S * D          # residual scratch
               + 3 * S * D    # fused qkv
               + H * S * S    # attention scores / probs
               + S * D        # attention context
               + S * FF       # MLP hidden
               + 2 * S * D)   # double-buffered (B_TILE,S,D) input block
    bt = 1
    for cand in range(1, min(B, 8) + 1):
        if B % cand == 0 and cand * act <= budget:
            bt = cand
    return bt


# ----------------------------- kernels ------------------------------------- #

def _linear_bias_kernel(x_ref, w_ref, b_ref, o_ref):
    """o = x @ w + b for one row-tile (x, w in bf16; f32 accumulation)."""
    o_ref[...] = (
        jnp.dot(x_ref[...], w_ref[...], preferred_element_type=jnp.float32)
        + b_ref[...]
    )


def _encoder_kernel(num_heads,
                    x_ref, pos_ref,
                    ln1g_ref, ln1b_ref, wqkv_ref, bqkv_ref, wo_ref, bo_ref,
                    ln2g_ref, ln2b_ref, w1_ref, b1_ref, w2_ref, b2_ref,
                    ng_ref, nb_ref, fw_ref, fb_ref,
                    o_ref, seq_ref):
    """One (batch-tile, layer) step of the fused transformer encoder + head.

    grid = (B // B_TILE, L): program_id(0)=batch tile, program_id(1)=layer.
    The residual stream lives in the f32 VMEM scratch `seq_ref` across the
    layer axis. HBM activation traffic: one (B_TILE, S, D) read at layer 0 and
    one (B_TILE, 1, NC) logits write at layer L-1 (final LN + classifier are
    fused into the last-layer branch).
    """
    layer = pl.program_id(1)
    n_layers = pl.num_programs(1)

    @pl.when(layer == 0)
    def _load_input():
        # Positional-embedding add fused into the first-layer load.
        seq_ref[...] = x_ref[...] + pos_ref[...]

    x = seq_ref[...]                                  # (BT, S, D) f32 residual
    BT, S, D = x.shape
    H = num_heads
    hd = D // H
    scale = 1.0 / math.sqrt(hd)
    M = BT * S

    # --- multi-head self attention (pre-norm) ---
    h = _layernorm(x, ln1g_ref[0], ln1b_ref[0]).astype(jnp.bfloat16).reshape(M, D)
    qkv = (jnp.dot(h, wqkv_ref[0], preferred_element_type=jnp.float32)
           + bqkv_ref[0])                             # (M, 3D) fused projection
    q = qkv[:, 0 * D:1 * D].astype(jnp.bfloat16).reshape(BT, S, H, hd)
    k = qkv[:, 1 * D:2 * D].astype(jnp.bfloat16).reshape(BT, S, H, hd)
    v = qkv[:, 2 * D:3 * D].astype(jnp.bfloat16).reshape(BT, S, H, hd)

    # Attention is independent per batch element; BT is a small static tile,
    # so unroll it and use the head-batched einsum for the score/context matmuls.
    ctx_rows = []
    for bi in range(BT):
        s = jnp.einsum("qhd,khd->hqk", q[bi], k[bi],
                       preferred_element_type=jnp.float32) * scale
        s = s - jnp.max(s, axis=-1, keepdims=True)
        p = jnp.exp(s)
        # Softmax denominator on the EUP (otherwise-idle slot).
        p = p * pl.reciprocal(jnp.sum(p, axis=-1, keepdims=True), approx=True)
        ctx_rows.append(
            jnp.einsum("hqk,khd->qhd", p.astype(jnp.bfloat16), v[bi],
                       preferred_element_type=jnp.float32).reshape(S, D))
    ctx = jnp.concatenate(ctx_rows, axis=0)           # (M, D) f32

    attn = (jnp.dot(ctx.astype(jnp.bfloat16), wo_ref[0],
                    preferred_element_type=jnp.float32) + bo_ref[0])
    x = x + attn.reshape(BT, S, D)

    # --- position-wise feed forward (pre-norm, exact erf GELU == F.gelu) ---
    h2 = _layernorm(x, ln2g_ref[0], ln2b_ref[0]).astype(jnp.bfloat16).reshape(M, D)
    ff = (jnp.dot(h2, w1_ref[0], preferred_element_type=jnp.float32)
          + b1_ref[0])
    ff = jax.nn.gelu(ff, approximate=False)
    ff = (jnp.dot(ff.astype(jnp.bfloat16), w2_ref[0],
                  preferred_element_type=jnp.float32) + b2_ref[0])
    x = x + ff.reshape(BT, S, D)

    seq_ref[...] = x

    # --- fused final LayerNorm + classifier on the class token only ---
    @pl.when(layer == n_layers - 1)
    def _store_logits():
        cls = x[:, 0, :]                              # (BT, D)
        ln = _layernorm(cls, ng_ref[...], nb_ref[...]).astype(jnp.bfloat16)
        logits = (jnp.dot(ln, fw_ref[...], preferred_element_type=jnp.float32)
                  + fb_ref[...])                      # (BT, NC)
        o_ref[...] = logits[:, None, :]


# ----------------------------- wrappers ------------------------------------ #

def patch_embed(patches, w, b, tile=512):
    """patches: (B*N, C*P*P) bf16, w: (C*P*P, D) bf16, b: (1, D) -> (B*N, D) f32.

    Fixed row tile + zero padding (no divisor search): big tiles keep the DMA
    near the HBM roofline, padding handles remainders.
    """
    M, K = patches.shape
    D = w.shape[1]
    if M <= tile:
        tm, Mp, xp = M, M, patches
    else:
        tm = tile
        Mp = ((M + tm - 1) // tm) * tm
        xp = jnp.pad(patches, ((0, Mp - M), (0, 0))) if Mp != M else patches

    out = pl.pallas_call(
        _linear_bias_kernel,
        grid=(Mp // tm,),
        in_specs=[pl.BlockSpec((tm, K), lambda i: (i, 0)),
                  pl.BlockSpec((K, D), lambda i: (0, 0)),
                  pl.BlockSpec((1, D), lambda i: (0, 0))],
        out_specs=pl.BlockSpec((tm, D), lambda i: (i, 0)),
        out_shape=jax.ShapeDtypeStruct((Mp, D), jnp.float32),
        compiler_params=pltpu.CompilerParams(
            dimension_semantics=("parallel",)),
    )(xp, w, b)
    return out[:M] if Mp != M else out


_LAYER_WEIGHT_NAMES = ("ln1g", "ln1b", "wqkv", "bqkv", "wo", "bo",
                       "ln2g", "ln2b", "w1", "b1", "w2", "b2")


def transformer_encoder_and_head(x, pos, params, num_heads):
    """x: (B, S, D) f32. ONE pallas_call: grid=(B//B_TILE, L) -> (B, NC) logits."""
    B, S, D = x.shape
    L = params["wqkv"].shape[0]
    FF = params["w1"].shape[2]
    NC = params["fw"].shape[1]

    vmem_limit = _vmem_limit_bytes()
    bt = _pick_batch_tile(B, S, D, FF, num_heads, NC, vmem_limit)

    args = [x, pos]
    in_specs = [pl.BlockSpec((bt, S, D), lambda b, l: (b, 0, 0)),
                pl.BlockSpec((1, S, D), lambda b, l: (0, 0, 0))]
    for name in _LAYER_WEIGHT_NAMES:            # stacked (L, r, c) per-layer weights
        w = params[name]
        in_specs.append(
            pl.BlockSpec((1,) + tuple(w.shape[1:]), lambda b, l: (l, 0, 0)))
        args.append(w)
    for name in ("ng", "nb", "fw", "fb"):       # head params, resident once
        w = params[name]
        in_specs.append(pl.BlockSpec(tuple(w.shape), lambda b, l: (0, 0)))
        args.append(w)

    out = pl.pallas_call(
        functools.partial(_encoder_kernel, num_heads),
        grid=(B // bt, L),
        in_specs=in_specs,
        out_specs=pl.BlockSpec((bt, 1, NC), lambda b, l: (b, 0, 0)),
        out_shape=jax.ShapeDtypeStruct((B, 1, NC), jnp.float32),
        scratch_shapes=[pltpu.VMEM((bt, S, D), jnp.float32)],
        compiler_params=pltpu.CompilerParams(
            dimension_semantics=("parallel", "arbitrary"),
            vmem_limit_bytes=vmem_limit),
    )(*args)
    return out[:, 0, :]


def vit_forward(x, params):
    """x: (B, C, H, W) float32 (NCHW, as in PyTorch)."""
    B, C, H, W = x.shape
    P = params["patch"]
    D = params["dim"]
    gh, gw = H // P, W // P
    N = gh * gw

    # Patch extraction (glue reshape): Conv2d(kernel=stride=P) == linear over
    # flattened (C, P, P) patch, token order (gy, gx). Cast once to bf16.
    patches = (
        x.reshape(B, C, gh, P, gw, P)
         .transpose(0, 2, 4, 1, 3, 5)
         .reshape(B * N, C * P * P)
    ).astype(jnp.bfloat16)
    emb = patch_embed(patches, params["pw"], params["pb"]).reshape(B, N, D)

    cls = jnp.broadcast_to(params["cls"], (B, 1, D))
    seq = jnp.concatenate([cls, emb], axis=1)          # (B, N+1, D)

    # Pos-embed add, all encoder layers, final LN and classifier are fused
    # into a single pallas_call; only (B, NC) logits come back from HBM.
    return transformer_encoder_and_head(seq, params["pos"], params, params["heads"])


# ----------------------------- param init ---------------------------------- #

def init_params(key, *, in_channels, patch, dim, ff_dim, num_heads,
                num_layers, image_size, num_classes):
    # The torch module assumes square images (h = w = image_size).
    gh = image_size // patch
    seq_len = gh * gh + 1
    cpp = in_channels * patch * patch
    L = num_layers

    counter = [0]

    def rnd(shape, scale=0.02, dtype=jnp.float32):
        counter[0] += 1
        k = jax.random.fold_in(key, counter[0])
        return (scale * jax.random.normal(k, shape)).astype(dtype)

    params = {
        "patch": patch, "dim": dim, "heads": num_heads,
        # patch embedding: conv weight (D, C, P, P) flattened to (C*P*P, D), bf16.
        "pw": rnd((cpp, dim), dtype=jnp.bfloat16),
        "pb": rnd((1, dim), 1e-3),
        "cls": jnp.zeros((1, 1, dim), jnp.float32),     # class token init 0
        "pos": rnd((1, seq_len, dim)),                  # pos emb std=0.02
        "ng": jnp.ones((1, dim), jnp.float32),          # final LN gamma
        "nb": jnp.zeros((1, dim), jnp.float32),         # final LN beta
        # NOTE: torch zero-inits the classifier; tiny random values are used so
        # the forward pass is numerically non-trivial (still deterministic).
        "fw": rnd((dim, num_classes), dtype=jnp.bfloat16),
        "fb": rnd((1, num_classes), 1e-3),
        # Per-layer weights stacked along a leading layer axis; fused QKV.
        "ln1g": jnp.ones((L, 1, dim), jnp.float32),
        "ln1b": jnp.zeros((L, 1, dim), jnp.float32),
        "wqkv": rnd((L, dim, 3 * dim), dtype=jnp.bfloat16),
        "bqkv": rnd((L, 1, 3 * dim), 1e-3),
        "wo": rnd((L, dim, dim), dtype=jnp.bfloat16),
        "bo": rnd((L, 1, dim), 1e-3),
        "ln2g": jnp.ones((L, 1, dim), jnp.float32),
        "ln2b": jnp.zeros((L, 1, dim), jnp.float32),
        "w1": rnd((L, dim, ff_dim), dtype=jnp.bfloat16),
        "b1": rnd((L, 1, ff_dim), 1e-3),
        "w2": rnd((L, ff_dim, dim), dtype=jnp.bfloat16),
        "b2": rnd((L, 1, dim), 1e-3),
    }
    return params


# ----------------------------- main ----------------------------------------- #

if __name__ == "__main__":
    # Small, self-consistent ViT config.
    B, C, IMG = 2, 4, 16
    PATCH, DIM, FF, HEADS, LAYERS, NUM_CLASSES = 8, 32, 64, 4, 2, 10

    key = jax.random.PRNGKey(0)
    k_x, k_p = jax.random.split(key)

    x = jax.random.normal(k_x, (B, C, IMG, IMG), dtype=jnp.float32)
    params = init_params(
        k_p, in_channels=C, patch=PATCH, dim=DIM, ff_dim=FF,
        num_heads=HEADS, num_layers=LAYERS, image_size=IMG,
        num_classes=NUM_CLASSES,
    )

    logits = vit_forward(x, params)
    jax.block_until_ready(logits)

    assert logits.shape == (B, NUM_CLASSES)
    assert bool(jnp.all(jnp.isfinite(logits)))
    # TODO(synk): dropout (train mode) has no inference-path effect; omitted.
    print("KERNEL_OK")
</pallas_src>

<mosaic_0001>
module attributes {stable_mosaic.version = 11 : i64} {
  func.func @_linear_bias_kernel(%arg0: i32, %arg1: memref<8x256xbf16, #tpu.memory_space<vmem>>, %arg2: memref<256x32xbf16, #tpu.memory_space<vmem>>, %arg3: memref<1x32xf32, #tpu.memory_space<vmem>>, %arg4: memref<8x32xf32, #tpu.memory_space<vmem>>) attributes {dimension_semantics = [#tpu.dimension_semantics<parallel>], iteration_bounds = array<i64: 1>, scalar_prefetch = 0 : i64, scratch_operands = 0 : i64, tpu.core_type = #tpu.core_type<tc>, window_params = [{transform_indices = @transform_0, window_bounds = array<i64: 8, 256>}, {pipeline_mode = #tpu.pipeline_mode<synchronous>, transform_indices = @transform_1, window_bounds = array<i64: 256, 32>}, {pipeline_mode = #tpu.pipeline_mode<synchronous>, transform_indices = @transform_2, window_bounds = array<i64: 1, 32>}, {transform_indices = @transform_3, window_bounds = array<i64: 8, 32>}]} {
    %c0 = arith.constant 0 : index
    %c0_0 = arith.constant 0 : index
    %0 = vector.load %arg1[%c0, %c0_0] : memref<8x256xbf16, #tpu.memory_space<vmem>>, vector<8x256xbf16>
    %c0_1 = arith.constant 0 : index
    %c0_2 = arith.constant 0 : index
    %1 = vector.load %arg2[%c0_1, %c0_2] : memref<256x32xbf16, #tpu.memory_space<vmem>>, vector<256x32xbf16>
    %cst = arith.constant dense<0.000000e+00> : vector<8x32xf32>
    %2 = tpu.matmul %0, %1, %cst {dimension_numbers = #tpu.dot_dimension_numbers<[1], [0], [0], [1], [0, 0, 1, 1], [], []>} : vector<8x256xbf16>, vector<256x32xbf16>, vector<8x32xf32> -> vector<8x32xf32>
    %c0_3 = arith.constant 0 : index
    %c0_4 = arith.constant 0 : index
    %3 = vector.load %arg3[%c0_3, %c0_4] : memref<1x32xf32, #tpu.memory_space<vmem>>, vector<1x32xf32>
    %4 = vector.broadcast %3 : vector<1x32xf32> to vector<8x32xf32>
    %5 = arith.addf %2, %4 : vector<8x32xf32>
    %c0_5 = arith.constant 0 : index
    %c0_6 = arith.constant 0 : index
    %6 = vector.load %arg4[%c0_5, %c0_6] : memref<8x32xf32, #tpu.memory_space<vmem>>, vector<8x32xf32>
    tpu.vector_store %arg4[%c0_5, %c0_6], %5 {strides = array<i32>} : memref<8x32xf32, #tpu.memory_space<vmem>>, vector<8x32xf32>,
    return
  }
  func.func @transform_0(%arg0: i32) -> (i32, i32) {
    %c0_i32 = arith.constant 0 : i32
    %c0_i32_0 = arith.constant 0 : i32
    return %arg0, %c0_i32 : i32, i32
  }
  func.func @transform_1(%arg0: i32) -> (i32, i32) {
    %c0_i32 = arith.constant 0 : i32
    %c0_i32_0 = arith.constant 0 : i32
    %c0_i32_1 = arith.constant 0 : i32
    return %c0_i32, %c0_i32_0 : i32, i32
  }
  func.func @transform_2(%arg0: i32) -> (i32, i32) {
    %c0_i32 = arith.constant 0 : i32
    %c0_i32_0 = arith.constant 0 : i32
    %c0_i32_1 = arith.constant 0 : i32
    return %c0_i32, %c0_i32_0 : i32, i32
  }
  func.func @transform_3(%arg0: i32) -> (i32, i32) {
    %c0_i32 = arith.constant 0 : i32
    %c0_i32_0 = arith.constant 0 : i32
    return %arg0, %c0_i32 : i32, i32
  }
}

</mosaic_0001>

<llo_original>
// kernel: tpu_custom_call.1
$region0: #{tpu_custom_call.1}
  #allocation0 [shape = 'u32[]', space=smem, size = 0x4, offset = 0x4, fixed_abs, tag = 'smem constant byte address 0x4 - core index']
  #allocation1 [shape = 'u32[144,128]{1,0:T(1,128)}', space=vmem, size = 0x12000, scoped, tag = 'internal scratch']
  %s0 = inlined_call_operand.vmem [shape: bf16[8,256], index: 0, kind: input, shape index: {}]
  %s1 = inlined_call_operand.vmem [shape: bf16[256,32], index: 1, kind: input, shape index: {}]
  %s2 = inlined_call_operand.vmem [shape: f32[1,32], index: 2, kind: input, shape index: {}]
  %s3 = inlined_call_operand.hbm [shape: f32[8,32], index: 3, kind: output, shape index: {}]
  %s4 = sld [smem:[#allocation0]]
  $region22: #{tpu_custom_call.1} parent=0
    _
  %s6 = ssub.s32 1, %s4
  %s7 = scalar_select 0, %s6, %s4
  $region1: #{tpu_custom_call.1} parent=0
    #allocation2 [shape = 'u8[4096]{0}', space=vmem, size = 0x1000, scoped, tag = 'output window, operand 0, single buffered']
    #allocation3 [shape = 's32[1]{0}', space=sflag, size = 0x4, scoped, tag = 'scoped memory for tpu_custom_call.1']
    %8 = vsyncpa [#allocation3], 0
    // Predicated region
    $region2: #{tpu_custom_call.1} parent=1 // pred_check
      _
    $region3: #{tpu_custom_call.1} parent=1 // pred_check_branch
      %10 = sbr.rel (0) target = $region5
    $region4: #{tpu_custom_call.1} parent=1 // pred_region
      _
    $region5: #{tpu_custom_call.1} parent=1 // pred_fallthru
      _
    // Predicated region
    $region6: #{tpu_custom_call.1} parent=1 // pred_check
      _
    $region7: #{tpu_custom_call.1} parent=1 // pred_check_branch
      %12 = sbr.rel (0) target = $region9
    $region8: #{tpu_custom_call.1} parent=1 // pred_region
      _
    $region9: #{tpu_custom_call.1} parent=1 // pred_fallthru
      _
    // Predicated region
    $region10: #{tpu_custom_call.1} parent=1 // pred_check
      _
    $region11: #{tpu_custom_call.1} parent=1 // pred_check_branch
      %14 = sbr.rel (0) target = $region13
    $region12: #{tpu_custom_call.1} parent=1 // pred_region
      _
    $region13: #{tpu_custom_call.1} parent=1 // pred_fallthru
      _
    %v16 = vld [vmem:[%s0] sm:$0xff]
    %v17 = vld [vmem:[%s1] sm:$0xf]
    %v18 = vld [vmem:[%s1 + $0x4] sm:$0xf]
    %v19 = vld [vmem:[%s1 + $0x8] sm:$0xf]
    %v20 = vld [vmem:[%s1 + $0xc] sm:$0xf]
    %v21 = vld [vmem:[%s1 + $0x10] sm:$0xf]
    %v22 = vld [vmem:[%s1 + $0x14] sm:$0xf]
    %v23 = vld [vmem:[%s1 + $0x18] sm:$0xf]
    %v24 = vld [vmem:[%s1 + $0x1c] sm:$0xf]
    %v25 = vld [vmem:[%s1 + $0x20] sm:$0xf]
    %v26 = vld [vmem:[%s1 + $0x24] sm:$0xf]
    %v27 = vld [vmem:[%s1 + $0x28] sm:$0xf]
    %v28 = vld [vmem:[%s1 + $0x2c] sm:$0xf]
    %v29 = vld [vmem:[%s1 + $0x30] sm:$0xf]
    %v30 = vld [vmem:[%s1 + $0x34] sm:$0xf]
    %v31 = vld [vmem:[%s1 + $0x38] sm:$0xf]
    %v32 = vld [vmem:[%s1 + $0x3c] sm:$0xf]
    %v33 = vld [vmem:[%s1 + $0x40] sm:$0xf]
    %v34 = vld [vmem:[%s1 + $0x44] sm:$0xf]
    %v35 = vld [vmem:[%s1 + $0x48] sm:$0xf]
    %v36 = vld [vmem:[%s1 + $0x4c] sm:$0xf]
    %v37 = vld [vmem:[%s1 + $0x50] sm:$0xf]
    %v38 = vld [vmem:[%s1 + $0x54] sm:$0xf]
    %v39 = vld [vmem:[%s1 + $0x58] sm:$0xf]
    %v40 = vld [vmem:[%s1 + $0x5c] sm:$0xf]
    %v41 = vld [vmem:[%s1 + $0x60] sm:$0xf]
    %v42 = vld [vmem:[%s1 + $0x64] sm:$0xf]
    %v43 = vld [vmem:[%s1 + $0x68] sm:$0xf]
    %v44 = vld [vmem:[%s1 + $0x6c] sm:$0xf]
    %v45 = vld [vmem:[%s1 + $0x70] sm:$0xf]
    %v46 = vld [vmem:[%s1 + $0x74] sm:$0xf]
    %v47 = vld [vmem:[%s1 + $0x78] sm:$0xf]
    %v48 = vld [vmem:[%s1 + $0x7c] sm:$0xf]
    %v49 = vld [vmem:[%s2] sm:$0x1]
    %v51 = vlaneseq
    %v52 = vshrl.u32 %v51, 7
    %v53 = vsub.s32 0, %v52
    %v54 = vrot.slane %v49, %v53
    %v57 = vunpack.c.l.b16 %v16
    %v58 = vunpack.c.h.b16 %v16
    %v59 = vpack.c.b16 %v57, %v57
    %v60 = vpack.c.b16 %v58, %v58
    %v95 = vunpack.c.l.b16 %v17
    %v96 = vunpack.c.l.b16 %v18
    %v97 = vunpack.c.l.b16 %v19
    %v98 = vunpack.c.l.b16 %v20
    %v99 = vunpack.c.l.b16 %v21
    %v100 = vunpack.c.l.b16 %v22
    %v101 = vunpack.c.l.b16 %v23
    %v102 = vunpack.c.l.b16 %v24
    %v103 = vunpack.c.l.b16 %v25
    %v104 = vunpack.c.l.b16 %v26
    %v105 = vunpack.c.l.b16 %v27
    %v106 = vunpack.c.l.b16 %v28
    %v107 = vunpack.c.l.b16 %v29
    %v108 = vunpack.c.l.b16 %v30
    %v109 = vunpack.c.l.b16 %v31
    %v110 = vunpack.c.l.b16 %v32
    %v111 = vunpack.c.l.b16 %v33
    %v112 = vunpack.c.l.b16 %v34
    %v113 = vunpack.c.l.b16 %v35
    %v114 = vunpack.c.l.b16 %v36
    %v115 = vunpack.c.l.b16 %v37
    %v116 = vunpack.c.l.b16 %v38
    %v117 = vunpack.c.l.b16 %v39
    %v118 = vunpack.c.l.b16 %v40
    %v119 = vunpack.c.l.b16 %v41
    %v120 = vunpack.c.l.b16 %v42
    %v121 = vunpack.c.l.b16 %v43
    %v122 = vunpack.c.l.b16 %v44
    %v123 = vunpack.c.l.b16 %v45
    %v124 = vunpack.c.l.b16 %v46
    %v125 = vunpack.c.l.b16 %v47
    %v126 = vunpack.c.l.b16 %v48
    %v127 = vpack.c.b16 %v96, %v95
    %v128 = vpack.c.b16 %v98, %v97
    %v129 = vpack.c.b16 %v100, %v99
    %v130 = vpack.c.b16 %v102, %v101
    %v131 = vpack.c.b16 %v104, %v103
    %v132 = vpack.c.b16 %v106, %v105
    %v133 = vpack.c.b16 %v108, %v107
    %v134 = vpack.c.b16 %v110, %v109
    %v135 = vpack.c.b16 %v112, %v111
    %v136 = vpack.c.b16 %v114, %v113
    %v137 = vpack.c.b16 %v116, %v115
    %v138 = vpack.c.b16 %v118, %v117
    %v139 = vpack.c.b16 %v120, %v119
    %v140 = vpack.c.b16 %v122, %v121
    %v141 = vpack.c.b16 %v124, %v123
    %v142 = vpack.c.b16 %v126, %v125
    %159 = vmatprep.subr.bf16.mxu0 0
    %160 = vmatpush1.bf16.msra.mxu0 %v127
    %161 = vmatprep.subr.bf16.mxu0 0
    %162 = vmatpush1.bf16.msra.mxu0 %v128
    %163 = vmatprep.subr.bf16.mxu0 0
    %164 = vmatpush1.bf16.msra.mxu0 %v129
    %165 = vmatprep.subr.bf16.mxu0 0
    %166 = vmatpush1.bf16.msra.mxu0 %v130
    %167 = vmatprep.subr.bf16.mxu0 0
    %168 = vmatpush1.bf16.msra.mxu0 %v131
    %169 = vmatprep.subr.bf16.mxu0 0
    %170 = vmatpush1.bf16.msra.mxu0 %v132
    %171 = vmatprep.subr.bf16.mxu0 0
    %172 = vmatpush1.bf16.msra.mxu0 %v133
    %173 = vmatprep.subr.bf16.mxu0 0
    %174 = vmatpush1.bf16.msra.mxu0 %v134
    %175 = vmatprep.subr.bf16.mxu0 0
    %176 = vmatpush1.bf16.msra.mxu0 %v135
    %177 = vmatprep.subr.bf16.mxu0 0
    %178 = vmatpush1.bf16.msra.mxu0 %v136
    %179 = vmatprep.subr.bf16.mxu0 0
    %180 = vmatpush1.bf16.msra.mxu0 %v137
    %181 = vmatprep.subr.bf16.mxu0 0
    %182 = vmatpush1.bf16.msra.mxu0 %v138
    %183 = vmatprep.subr.bf16.mxu0 0
    %184 = vmatpush1.bf16.msra.mxu0 %v139
    %185 = vmatprep.subr.bf16.mxu0 0
    %186 = vmatpush1.bf16.msra.mxu0 %v140
    %187 = vmatprep.subr.bf16.mxu0 0
    %188 = vmatpush1.bf16.msra.mxu0 %v141
    %189 = vmatprep.subr.bf16.mxu0 0
    %190 = vmatpush1.bf16.msra.mxu0 %v142
    %191 = vmatprep.mubr.bf16.mxu0 %v60
    %192 = vmatmul.mubr.bf16.gmra.mrb[0].mxu0 %v59
    %v193 = vpop.f32.mrb[0].mxu0
    %v194 = vadd.f32 %v54, %v193
    %v195 = vpop.f32.mrb[0].mxu0
    %v196 = vpop.f32.mrb[0].mxu0
    %v197 = vpop.f32.mrb[0].mxu0
    %198 = vdwg.mxu0
    %vm199 = vcmask 261120
    %200 = vst.msk [vmem:[#allocation2] sm:$0xff] %vm199, %v194
    // Predicated region
    $region14: #{tpu_custom_call.1} parent=1 // pred_check
      _
    $region15: #{tpu_custom_call.1} parent=1 // pred_check_branch
      %202 = sbr.rel (0) target = $region17
    $region16: #{tpu_custom_call.1} parent=1 // pred_region
      %s204 = ssub.s32 128, 128
      %205 = vsyncadd [#allocation3], %s204
      %s207 = sshll.u32 [#allocation2], 4
      %s208 = int_to_ptr.vmem [resolvable:$true] %s207
      %210 = dma.vmem_to_hbm [thread:$0]  %s208, 128, %s3, [#allocation3]
    $region17: #{tpu_custom_call.1} parent=1 // pred_fallthru
      _
    // Predicated region
    $region18: #{tpu_custom_call.1} parent=1 // pred_check
      _
    $region19: #{tpu_custom_call.1} parent=1 // pred_check_branch
      %212 = sbr.rel (0) target = $region21
    $region20: #{tpu_custom_call.1} parent=1 // pred_region
      %213 = dma.done [#allocation3], 128
    $region21: #{tpu_custom_call.1} parent=1 // pred_fallthru
      _
    %214 = vsyncpa [#allocation3], 1

</llo_original>
